<compile_context>
chip_gen: v5e
topology: v5e:2x2
jax: 0.10.0
libtpu: 0.0.40
codegen_flags: <defaults>
</compile_context>

<pallas_src>
import functools

import jax
import jax.numpy as jnp
from jax import lax
from jax.experimental import pallas as pl
from jax.experimental.pallas import tpu as pltpu


_LANES = 128
_SUBLANES = 8
# Below this element count a fused XLA reduction beats a pallas_call launch.
_MIN_PALLAS_ELEMENTS = 64 * 1024


def _ref_div_loss(lam: jax.Array) -> jax.Array:
    """Pure-JAX reference mirroring the PyTorch module (also the small-size path)."""
    batch = lam.shape[0]
    lam2 = lam.reshape(batch, -1).astype(jnp.float32)
    mu = lam2.mean(0)
    var = ((lam2 - mu) ** 2).mean(0, keepdims=True)
    std = jnp.sqrt(jnp.maximum(var, 1e-12))
    return -jnp.sum(std)


def _partials_kernel(x_ref, sum_ref, sumsq_ref, *,
                     total_rows: int, tile_rows: int, tiles_per_core: int,
                     needs_mask: bool):
    """One grid step over a (tile_rows, 128) slab of the flattened input.

    x_ref     : (tile_rows, 128) input block in VMEM (dense, fully occupied)
    sum_ref   : (1, 8, 128) f32 output block — lane-wise partial sums
    sumsq_ref : (1, 8, 128) f32 output block — lane-wise partial sums of squares
    """
    k = pl.program_id(1)                         # reduction axis (last), "arbitrary"

    @pl.when(k == 0)
    def _init():
        sum_ref[...] = jnp.zeros_like(sum_ref)
        sumsq_ref[...] = jnp.zeros_like(sumsq_ref)

    x = x_ref[...].astype(jnp.float32)           # (tile_rows, 128)

    if needs_mask:
        # Rows past the end of the slab (partial last tile, or the overshoot
        # tile of an uneven core split) are block padding with unspecified
        # contents: zero them.  Mask is per-row (constant across lanes).
        c = pl.program_id(0)
        base = (c * tiles_per_core + k) * tile_rows
        row = lax.broadcasted_iota(jnp.int32, (tile_rows, 1), 0)
        x = jnp.where(base + row < total_rows, x, 0.0)

    # Lane-wise partial accumulation: summing over the leading (vreg-group)
    # axis is pure elementwise VPU adds; no cross-lane (XLU) reduce here.
    xr = x.reshape(tile_rows // _SUBLANES, _SUBLANES, _LANES)
    sum_ref[...] += jnp.sum(xr, axis=0, keepdims=True)
    sumsq_ref[...] += jnp.sum(xr * xr, axis=0, keepdims=True)


def _choose_tile_rows(num_rows: int, itemsize: int,
                      vmem_budget_bytes: int = 4 * 1024 * 1024) -> int:
    """Largest multiple-of-8 row tile within the per-buffer VMEM budget.

    Prefers an exact divisor of num_rows (within 2x of the budget-optimal size)
    so the partial-tile mask stays out of the hot loop.
    """
    bytes_per_row = _LANES * max(itemsize, 1)
    max_tr = min(num_rows, max(1, vmem_budget_bytes // bytes_per_row))
    max_tr = max(_SUBLANES, (max_tr // _SUBLANES) * _SUBLANES)
    tr = max_tr
    while tr >= max(_SUBLANES, max_tr // 2):
        if num_rows % tr == 0:
            return tr
        tr -= _SUBLANES
    return max_tr


def div_loss(lam: jax.Array, *, tile_rows: int | None = None,
             num_cores: int = 2,
             min_pallas_elements: int = _MIN_PALLAS_ELEMENTS) -> jax.Array:
    """Pallas TPU implementation of DivLoss.forward(lam). Returns an f32 scalar."""
    assert lam.ndim >= 1, "expected lam with a leading batch dimension"
    batch = lam.shape[0]
    lam2 = lam.reshape(batch, -1)                 # (B, F), F = prod(rest) or 1
    feat = lam2.shape[1]
    n = batch * feat
    itemsize = jnp.dtype(lam2.dtype).itemsize

    # The Pallas path needs: lane <-> feature mapping (F | 128), a dense
    # contiguous reshape into (R, 128) (128 | n), and at least one (8, 128) tile.
    lanes_ok = feat <= _LANES and _LANES % feat == 0
    dense_ok = (n % _LANES == 0) and (n // _LANES) >= _SUBLANES
    if (not lanes_ok) or (not dense_ok) or n < min_pallas_elements:
        # Tiny / awkward shapes: a fused XLA reduction beats kernel launch cost.
        return _ref_div_loss(lam)

    num_rows = n // _LANES
    # Row-major contiguous reshape — no transpose HLO, no extra HBM passes.
    slab = lam2.reshape(num_rows, _LANES)

    tr = tile_rows if tile_rows is not None else _choose_tile_rows(num_rows, itemsize)
    assert tr % _SUBLANES == 0 and 0 < tr <= num_rows, tr
    num_tiles = pl.cdiv(num_rows, tr)
    nc = max(1, min(num_cores, num_tiles))        # parallel (megacore) split
    tiles_per_core = pl.cdiv(num_tiles, nc)
    needs_mask = (nc * tiles_per_core * tr) != num_rows
    needs_clamp = (nc * tiles_per_core) != num_tiles

    if needs_clamp:
        # Keep the DMA in-bounds for the overshoot tiles of an uneven split;
        # their contribution is zeroed by the in-kernel mask.
        def in_index(c, k):
            return (jnp.minimum(c * tiles_per_core + k, num_tiles - 1), 0)
    else:
        def in_index(c, k):
            return (c * tiles_per_core + k, 0)

    kernel = functools.partial(
        _partials_kernel, total_rows=num_rows, tile_rows=tr,
        tiles_per_core=tiles_per_core, needs_mask=needs_mask)

    part_shape = jax.ShapeDtypeStruct((nc, _SUBLANES, _LANES), jnp.float32)
    out_block = pl.BlockSpec((1, _SUBLANES, _LANES), lambda c, k: (c, 0, 0))

    sums, sumsqs = pl.pallas_call(
        kernel,
        out_shape=(part_shape, part_shape),
        grid_spec=pltpu.PrefetchScalarGridSpec(
            num_scalar_prefetch=0,
            grid=(nc, tiles_per_core),              # reduction axis last
            in_specs=[pl.BlockSpec((tr, _LANES), in_index)],
            out_specs=[out_block, out_block],
        ),
        compiler_params=pltpu.CompilerParams(
            dimension_semantics=("parallel", "arbitrary"),
            vmem_limit_bytes=32 * 1024 * 1024,
        ),
        cost_estimate=pl.CostEstimate(
            flops=3 * n,
            transcendentals=0,
            bytes_accessed=n * itemsize + 2 * nc * _SUBLANES * _LANES * 4,
        ),
    )(slab)

    # Finalize on ~2*nc KiB of partials (fused XLA; negligible).
    col_sum = jnp.sum(sums, axis=(0, 1))           # (128,) per-lane totals
    col_sq = jnp.sum(sumsqs, axis=(0, 1))          # (128,)
    # Lane c always holds feature c % F (since F divides 128 and 128 | n).
    feat_sum = col_sum.reshape(-1, feat).sum(axis=0)   # (F,)
    feat_sq = col_sq.reshape(-1, feat).sum(axis=0)     # (F,)
    inv_b = jnp.float32(1.0 / batch)
    mean = feat_sum * inv_b
    var = feat_sq * inv_b - mean * mean            # E[x^2] - E[x]^2 (lam in [0,1])
    std = jnp.sqrt(jnp.maximum(var, 1e-12))        # clamp(min=1e-12).sqrt()
    return -jnp.sum(std)


if __name__ == "__main__":
    key = jax.random.PRNGKey(0)
    k1, k2, k3, k4 = jax.random.split(key, 4)

    # 1) Kernel path, single (8, 128) tile: B*F = 1024.
    lam1 = jax.random.uniform(k1, (512, 2), dtype=jnp.float32)
    out1 = jax.block_until_ready(div_loss(lam1, min_pallas_elements=0))
    ref1 = _ref_div_loss(lam1)
    assert jnp.allclose(out1, ref1, atol=1e-6, rtol=1e-6), (out1, ref1)

    # 2) Kernel path, ragged rows: R = 65, tile_rows = 32 -> 3 tiles split over
    #    a 2-wide parallel axis (exercises index clamp + tail mask).
    lam2 = jax.random.uniform(k2, (4160, 2), dtype=jnp.float32)
    out2 = jax.block_until_ready(
        div_loss(lam2, tile_rows=32, min_pallas_elements=0))
    ref2 = _ref_div_loss(lam2)
    assert jnp.allclose(out2, ref2, atol=1e-5, rtol=1e-5), (out2, ref2)

    # 3) Kernel path, even multi-tile split, mask-free hot loop:
    #    R = 128, tile_rows = 32 -> 4 tiles, 2 per core.
    lam3 = jax.random.uniform(k3, (8192, 2), dtype=jnp.float32)
    out3 = jax.block_until_ready(
        div_loss(lam3, tile_rows=32, min_pallas_elements=0))
    ref3 = _ref_div_loss(lam3)
    assert jnp.allclose(out3, ref3, atol=1e-5, rtol=1e-5), (out3, ref3)

    # 4) Realistic IDM shape (B=16, F=2): auto-dispatches to the fused XLA path.
    lam4 = jax.random.uniform(k4, (16, 2), dtype=jnp.float32)
    out4 = jax.block_until_ready(div_loss(lam4))
    ref4 = _ref_div_loss(lam4)
    assert jnp.allclose(out4, ref4, atol=1e-6, rtol=1e-6), (out4, ref4)

    print("KERNEL_OK")
</pallas_src>

<mosaic_0001>
module attributes {stable_mosaic.version = 11 : i64} {
  func.func @_partials_kernel(%arg0: i32, %arg1: i32, %arg2: memref<8x128xf32, #tpu.memory_space<vmem>>, %arg3: memref<1x8x128xf32, #tpu.memory_space<vmem>>, %arg4: memref<1x8x128xf32, #tpu.memory_space<vmem>>) attributes {dimension_semantics = [#tpu.dimension_semantics<parallel>, #tpu.dimension_semantics<arbitrary>], iteration_bounds = array<i64: 1, 1>, scalar_prefetch = 0 : i64, scratch_operands = 0 : i64, tpu.core_type = #tpu.core_type<tc>, window_params = [{transform_indices = @transform_0, window_bounds = array<i64: 8, 128>}, {transform_indices = @transform_1, window_bounds = array<i64: 1, 8, 128>}, {transform_indices = @transform_2, window_bounds = array<i64: 1, 8, 128>}]} {
    %c0_i32 = arith.constant 0 : i32
    %0 = arith.cmpi eq, %arg1, %c0_i32 : i32
    %1 = arith.extui %0 : i1 to i32
    %c0_i32_0 = arith.constant 0 : i32
    %2 = arith.cmpi ne, %1, %c0_i32_0 : i32
    scf.if %2 {
      %cst_15 = arith.constant 0.000000e+00 : f32
      %16 = vector.broadcast %cst_15 : f32 to vector<1x8x128xf32>
      %c0_16 = arith.constant 0 : index
      %c0_17 = arith.constant 0 : index
      %c0_18 = arith.constant 0 : index
      %17 = vector.load %arg3[%c0_16, %c0_17, %c0_18] : memref<1x8x128xf32, #tpu.memory_space<vmem>>, vector<1x8x128xf32>
      tpu.vector_store %arg3[%c0_16, %c0_17, %c0_18], %16 {strides = array<i32>} : memref<1x8x128xf32, #tpu.memory_space<vmem>>, vector<1x8x128xf32>,
      %cst_19 = arith.constant 0.000000e+00 : f32
      %18 = vector.broadcast %cst_19 : f32 to vector<1x8x128xf32>
      %c0_20 = arith.constant 0 : index
      %c0_21 = arith.constant 0 : index
      %c0_22 = arith.constant 0 : index
      %19 = vector.load %arg4[%c0_20, %c0_21, %c0_22] : memref<1x8x128xf32, #tpu.memory_space<vmem>>, vector<1x8x128xf32>
      tpu.vector_store %arg4[%c0_20, %c0_21, %c0_22], %18 {strides = array<i32>} : memref<1x8x128xf32, #tpu.memory_space<vmem>>, vector<1x8x128xf32>,
    } else {
    }
    %c0 = arith.constant 0 : index
    %c0_1 = arith.constant 0 : index
    %3 = vector.load %arg2[%c0, %c0_1] : memref<8x128xf32, #tpu.memory_space<vmem>>, vector<8x128xf32>
    %4 = vector.shape_cast %3 : vector<8x128xf32> to vector<1x8x128xf32>
    %c0_2 = arith.constant 0 : index
    %c0_3 = arith.constant 0 : index
    %c0_4 = arith.constant 0 : index
    %5 = vector.load %arg3[%c0_2, %c0_3, %c0_4] : memref<1x8x128xf32, #tpu.memory_space<vmem>>, vector<1x8x128xf32>
    %cst = arith.constant dense<0.000000e+00> : vector<8x128xf32>
    %6 = vector.multi_reduction <add>, %4, %cst [0] : vector<1x8x128xf32> to vector<8x128xf32>
    %7 = vector.shape_cast %6 : vector<8x128xf32> to vector<1x8x128xf32>
    %8 = arith.addf %5, %7 : vector<1x8x128xf32>
    %c0_5 = arith.constant 0 : index
    %c0_6 = arith.constant 0 : index
    %c0_7 = arith.constant 0 : index
    %9 = vector.load %arg3[%c0_5, %c0_6, %c0_7] : memref<1x8x128xf32, #tpu.memory_space<vmem>>, vector<1x8x128xf32>
    tpu.vector_store %arg3[%c0_5, %c0_6, %c0_7], %8 {strides = array<i32>} : memref<1x8x128xf32, #tpu.memory_space<vmem>>, vector<1x8x128xf32>,
    %c0_8 = arith.constant 0 : index
    %c0_9 = arith.constant 0 : index
    %c0_10 = arith.constant 0 : index
    %10 = vector.load %arg4[%c0_8, %c0_9, %c0_10] : memref<1x8x128xf32, #tpu.memory_space<vmem>>, vector<1x8x128xf32>
    %11 = arith.mulf %4, %4 : vector<1x8x128xf32>
    %cst_11 = arith.constant dense<0.000000e+00> : vector<8x128xf32>
    %12 = vector.multi_reduction <add>, %11, %cst_11 [0] : vector<1x8x128xf32> to vector<8x128xf32>
    %13 = vector.shape_cast %12 : vector<8x128xf32> to vector<1x8x128xf32>
    %14 = arith.addf %10, %13 : vector<1x8x128xf32>
    %c0_12 = arith.constant 0 : index
    %c0_13 = arith.constant 0 : index
    %c0_14 = arith.constant 0 : index
    %15 = vector.load %arg4[%c0_12, %c0_13, %c0_14] : memref<1x8x128xf32, #tpu.memory_space<vmem>>, vector<1x8x128xf32>
    tpu.vector_store %arg4[%c0_12, %c0_13, %c0_14], %14 {strides = array<i32>} : memref<1x8x128xf32, #tpu.memory_space<vmem>>, vector<1x8x128xf32>,
    return
  }
  func.func @transform_0(%arg0: i32, %arg1: i32) -> (i32, i32) {
    %c1_i32 = arith.constant 1 : i32
    %0 = arith.muli %arg0, %c1_i32 : i32
    %1 = arith.addi %0, %arg1 : i32
    %c0_i32 = arith.constant 0 : i32
    %c0_i32_0 = arith.constant 0 : i32
    return %1, %c0_i32 : i32, i32
  }
  func.func @transform_1(%arg0: i32, %arg1: i32) -> (i32, i32, i32) {
    %c0_i32 = arith.constant 0 : i32
    %c0_i32_0 = arith.constant 0 : i32
    %c0_i32_1 = arith.constant 0 : i32
    return %arg0, %c0_i32, %c0_i32_0 : i32, i32, i32
  }
  func.func @transform_2(%arg0: i32, %arg1: i32) -> (i32, i32, i32) {
    %c0_i32 = arith.constant 0 : i32
    %c0_i32_0 = arith.constant 0 : i32
    %c0_i32_1 = arith.constant 0 : i32
    return %arg0, %c0_i32, %c0_i32_0 : i32, i32, i32
  }
}

</mosaic_0001>

<llo_original>
// kernel: tpu_custom_call.1
$region0: #{tpu_custom_call.1}
  #allocation0 [shape = 'u32[]', space=smem, size = 0x4, offset = 0x4, fixed_abs, tag = 'smem constant byte address 0x4 - core index']
  #allocation1 [shape = 'u32[72,128]{1,0:T(1,128)}', space=vmem, size = 0x9000, scoped, tag = 'internal scratch']
  %s0 = inlined_call_operand.hbm [shape: f32[8,128], index: 0, kind: input, shape index: {}]
  %s1 = inlined_call_operand.hbm [shape: f32[1,8,128], index: 1, kind: output, shape index: {0}]
  %s2 = inlined_call_operand.hbm [shape: f32[1,8,128], index: 2, kind: output, shape index: {1}]
  %3 = xla_tuple %s1, %s2
  %s4 = sld [smem:[#allocation0]]
  $region30: #{tpu_custom_call.1} parent=0
    _
  %s6 = ssub.s32 1, %s4
  %s7 = scalar_select 0, %s6, %s4
  $region1: #{tpu_custom_call.1} parent=0
    #allocation2 [shape = 'u8[4096]{0}', space=vmem, size = 0x1000, scoped, tag = 'input window, operand 0, single buffered']
    #allocation3 [shape = 's32[1]{0}', space=sflag, size = 0x4, scoped, tag = 'scoped memory for tpu_custom_call.1']
    #allocation4 [shape = 's32[1]{0}', space=sflag, size = 0x4, scoped, tag = 'scoped memory for tpu_custom_call.1']
    #allocation5 [shape = 'u8[4096]{0}', space=vmem, size = 0x1000, scoped, tag = 'output window, operand 0, single buffered']
    #allocation6 [shape = 'u8[4096]{0}', space=vmem, size = 0x1000, scoped, tag = 'output window, operand 1, single buffered']
    #allocation7 [shape = 's32[1]{0}', space=sflag, size = 0x4, scoped, tag = 'scoped memory for tpu_custom_call.1']
    %8 = vsyncpa [#allocation3], 0
    %9 = vsyncpa [#allocation4], 0
    %10 = vsyncpa [#allocation7], 0
    // Predicated region
    $region2: #{tpu_custom_call.1} parent=1 // pred_check
      _
    $region3: #{tpu_custom_call.1} parent=1 // pred_check_branch
      %12 = sbr.rel (0) target = $region5
    $region4: #{tpu_custom_call.1} parent=1 // pred_region
      %s13 = sadd.s32 0, 0
      %15 = vsyncadd [#allocation3], 0
      %s16 = smul.addr %s13, 8
      %s17 = scalar_lea.hbm %s0, %s16
      %s19 = sshll.u32 %s17, 4
      %s20 = int_to_ptr.hbm [resolvable:$true] %s19
      %s21 = sshll.u32 [#allocation2], 4
      %s22 = int_to_ptr.vmem [resolvable:$true] %s21
      %24 = dma.hbm_to_vmem [thread:$0]  %s20, 128, %s22, [#allocation3]
    $region5: #{tpu_custom_call.1} parent=1 // pred_fallthru
      _
    // Predicated region
    $region6: #{tpu_custom_call.1} parent=1 // pred_check
      _
    $region7: #{tpu_custom_call.1} parent=1 // pred_check_branch
      %26 = sbr.rel (0) target = $region9
    $region8: #{tpu_custom_call.1} parent=1 // pred_region
      %28 = dma.done [#allocation3], 128
    $region9: #{tpu_custom_call.1} parent=1 // pred_fallthru
      _
    %s29 = sadd.s32 0, 0
    %p30 = scmp.eq.s32.totalorder 0, 0
    // Predicated region
    $region10: #{tpu_custom_call.1} parent=1 // pred_check
      %p31 = pneg %p30
    $region11: #{tpu_custom_call.1} parent=1 // pred_check_branch
      %33 = sbr.rel (%p31) target = $region13
    $region12: #{tpu_custom_call.1} parent=1 // pred_region
      %34 = vst [vmem:[#allocation5] sm:$0xff] 0.0
      %35 = vst [vmem:[#allocation6] sm:$0xff] 0.0
    $region13: #{tpu_custom_call.1} parent=1 // pred_fallthru
      _
    %v36 = vld [vmem:[#allocation2] sm:$0xff]
    %v37 = vld [vmem:[#allocation5] sm:$0xff]
    %v38 = vadd.f32 %v36, 0.0
    %v39 = vadd.f32 %v37, %v38
    %40 = vst [vmem:[#allocation5] sm:$0xff] %v39
    %v41 = vld [vmem:[#allocation6] sm:$0xff]
    %v42 = vmul.f32 %v36, %v36
    %v43 = vadd.f32 %v42, 0.0
    %v44 = vadd.f32 %v41, %v43
    %45 = vst [vmem:[#allocation6] sm:$0xff] %v44
    // Predicated region
    $region14: #{tpu_custom_call.1} parent=1 // pred_check
      _
    $region15: #{tpu_custom_call.1} parent=1 // pred_check_branch
      %47 = sbr.rel (0) target = $region17
    $region16: #{tpu_custom_call.1} parent=1 // pred_region
      %49 = vsyncadd [#allocation4], 0
      %s51 = sshll.u32 [#allocation5], 4
      %s52 = int_to_ptr.vmem [resolvable:$true] %s51
      %s53 = sshll.u32 %s1, 4
      %s54 = int_to_ptr.hbm [resolvable:$true] %s53
      %56 = dma.vmem_to_hbm [thread:$0]  %s52, 128, %s54, [#allocation4]
    $region17: #{tpu_custom_call.1} parent=1 // pred_fallthru
      _
    // Predicated region
    $region18: #{tpu_custom_call.1} parent=1 // pred_check
      _
    $region19: #{tpu_custom_call.1} parent=1 // pred_check_branch
      %58 = sbr.rel (0) target = $region21
    $region20: #{tpu_custom_call.1} parent=1 // pred_region
      %60 = vsyncadd [#allocation7], 0
      %s62 = sshll.u32 [#allocation6], 4
      %s63 = int_to_ptr.vmem [resolvable:$true] %s62
      %s64 = sshll.u32 %s2, 4
      %s65 = int_to_ptr.hbm [resolvable:$true] %s64
      %67 = dma.vmem_to_hbm [thread:$0]  %s63, 128, %s65, [#allocation7]
    $region21: #{tpu_custom_call.1} parent=1 // pred_fallthru
      _
    // Predicated region
    $region22: #{tpu_custom_call.1} parent=1 // pred_check
      _
    $region23: #{tpu_custom_call.1} parent=1 // pred_check_branch
      %69 = sbr.rel (0) target = $region25
    $region24: #{tpu_custom_call.1} parent=1 // pred_region
      %71 = dma.done [#allocation4], 128
    $region25: #{tpu_custom_call.1} parent=1 // pred_fallthru
      _
    // Predicated region
    $region26: #{tpu_custom_call.1} parent=1 // pred_check
      _
    $region27: #{tpu_custom_call.1} parent=1 // pred_check_branch
      %73 = sbr.rel (0) target = $region29
    $region28: #{tpu_custom_call.1} parent=1 // pred_region
      %75 = dma.done [#allocation7], 128
    $region29: #{tpu_custom_call.1} parent=1 // pred_fallthru
      _
    %76 = vsyncpa [#allocation3], 1
    %77 = vsyncpa [#allocation4], 1
    %78 = vsyncpa [#allocation7], 1

</llo_original>
